<compile_context>
chip_gen: v5e
topology: v5e:2x2
jax: 0.10.0
libtpu: 0.0.40
codegen_flags: <defaults>
</compile_context>

<pallas_src>
import functools

import jax
import jax.numpy as jnp
from jax import lax
from jax.experimental import pallas as pl
from jax.experimental.pallas import tpu as pltpu


def _pow_static(q, gamma):
    """q ** gamma; multiply chain for whole-number gamma, safe pow otherwise."""
    g = float(gamma)
    if g.is_integer() and 0 <= g <= 64:
        k = int(g)
        if k == 0:
            return jnp.ones_like(q)
        result = None
        base = q
        while k > 0:
            if k & 1:
                result = base if result is None else result * base
            k >>= 1
            if k:
                base = base * base
        return result
    # Non-integer gamma: q >= 0 by construction (ce clamped), guard log(0).
    return jnp.exp(g * jnp.log(jnp.maximum(q, 1e-30)))


def focal_loss_kernel(logits_ref, targets_ref, at_ref, out_ref,
                      *, gamma, n_valid, tile_n):
    i = pl.program_id(0)

    x = logits_ref[...].astype(jnp.float32)     # (TILE_N, C)
    tgt = targets_ref[...]                      # (TILE_N, 1) int32
    at = at_ref[...].astype(jnp.float32)        # (TILE_N, 1)  == alpha[target]

    tn, c = x.shape

    # Numerically-stable log-sum-exp over the class axis.
    m = jnp.max(x, axis=-1, keepdims=True)                              # (TILE_N, 1)
    lse = m + jnp.log(jnp.sum(jnp.exp(x - m), axis=-1, keepdims=True))  # (TILE_N, 1)

    # Target logit via one-hot select (no dynamic per-row indexing on TPU).
    col = lax.broadcasted_iota(jnp.int32, (tn, c), 1)
    logit_t = jnp.sum(jnp.where(col == tgt, x, 0.0), axis=-1, keepdims=True)

    # ce >= 0 mathematically; the clamp kills -epsilon fp rounding so pt <= 1.
    ce = jnp.maximum(lse - logit_t, 0.0)
    pt = jnp.exp(-ce)
    q = 1.0 - pt

    focal = at * _pow_static(q, gamma) * ce                             # (TILE_N, 1)

    # Mask rows of the ragged last tile (out-of-bounds input rows hold
    # unspecified values, possibly NaN -> must be selected away, not multiplied).
    row = lax.broadcasted_iota(jnp.int32, (tn, 1), 0) + i * tile_n
    focal = jnp.where(row < n_valid, focal, 0.0)

    partial = jnp.sum(focal)                                            # scalar
    out_ref[...] = jnp.full(out_ref.shape, partial, dtype=out_ref.dtype)


def focal_loss(logits, targets, alpha=None, gamma=2.0, tile_n_max=512):
    """logits: (N, C); targets: (N,) int; alpha: (C,) or None -> scalar mean focal loss."""
    if isinstance(logits, dict):
        logits = logits["logits"]
    n, c = logits.shape

    if alpha is None:
        alpha = jnp.ones((c,), dtype=jnp.float32)
    alpha = jnp.asarray(alpha, dtype=jnp.float32)

    targets = jnp.asarray(targets, dtype=jnp.int32).reshape(n, 1)
    at = alpha[targets[:, 0]].reshape(n, 1)          # alpha[target], (N, 1)

    # Batch tile: ~2 MiB of logits per tile (double-buffered by the pipeline),
    # rounded to a sublane multiple; never larger than the (rounded-up) batch.
    bytes_per_row = max(1, c * jnp.dtype(logits.dtype).itemsize)
    tile_n = int((2 * 1024 * 1024) // bytes_per_row)
    tile_n = max(8, min(tile_n_max, (tile_n // 8) * 8))
    tile_n = min(tile_n, ((n + 7) // 8) * 8)
    n_tiles = pl.cdiv(n, tile_n)

    kernel = functools.partial(focal_loss_kernel, gamma=float(gamma),
                               n_valid=n, tile_n=tile_n)

    partials = pl.pallas_call(
        kernel,
        out_shape=jax.ShapeDtypeStruct((n_tiles, 8, 128), jnp.float32),
        grid_spec=pltpu.PrefetchScalarGridSpec(
            num_scalar_prefetch=0,
            grid=(n_tiles,),
            in_specs=[
                pl.BlockSpec((tile_n, c), lambda i: (i, 0)),   # logits tile (full C)
                pl.BlockSpec((tile_n, 1), lambda i: (i, 0)),   # targets
                pl.BlockSpec((tile_n, 1), lambda i: (i, 0)),   # alpha[target]
            ],
            out_specs=pl.BlockSpec((1, 8, 128), lambda i: (i, 0, 0)),  # per-tile partial
        ),
        compiler_params=pltpu.CompilerParams(
            dimension_semantics=("parallel",)),
    )(logits, targets, at)

    return jnp.sum(partials[:, 0, 0]) / jnp.float32(n)


def _reference(logits, targets, alpha, gamma):
    lse = jax.nn.logsumexp(logits.astype(jnp.float32), axis=-1)
    ce = jnp.maximum(lse - logits[jnp.arange(logits.shape[0]), targets], 0.0)
    pt = jnp.exp(-ce)
    at = alpha[targets]
    return jnp.mean(at * (1.0 - pt) ** gamma * ce)


if __name__ == "__main__":
    key = jax.random.PRNGKey(0)

    # --- Test 1: module defaults (num_classes=3, alpha=None -> ones, gamma=2) ---
    num_classes, batch, gamma = 3, 8, 2.0
    k1, k2, key = jax.random.split(key, 3)
    logits = jax.random.normal(k1, (batch, num_classes), dtype=jnp.float32)
    targets = jax.random.randint(k2, (batch,), 0, num_classes, dtype=jnp.int32)

    loss = focal_loss(logits, targets, alpha=None, gamma=gamma)
    jax.block_until_ready(loss)
    ref = _reference(logits, targets, jnp.ones((num_classes,), jnp.float32), gamma)
    assert jnp.allclose(loss, ref, rtol=1e-5, atol=1e-6), (loss, ref)

    # --- Test 2: multi-tile ragged batch, custom alpha, non-integer gamma ---
    num_classes2, batch2, gamma2 = 10, 600, 1.5
    k3, k4, k5, key = jax.random.split(key, 4)
    logits2 = jax.random.normal(k3, (batch2, num_classes2), dtype=jnp.float32)
    targets2 = jax.random.randint(k4, (batch2,), 0, num_classes2, dtype=jnp.int32)
    alpha2 = jax.random.uniform(k5, (num_classes2,), minval=0.1, maxval=1.0,
                                dtype=jnp.float32)

    loss2 = focal_loss(logits2, targets2, alpha2, gamma=gamma2, tile_n_max=256)
    jax.block_until_ready(loss2)
    ref2 = _reference(logits2, targets2, alpha2, gamma2)
    assert jnp.allclose(loss2, ref2, rtol=1e-4, atol=1e-6), (loss2, ref2)

    print("KERNEL_OK")
</pallas_src>

<mosaic_0001>
module attributes {stable_mosaic.version = 11 : i64} {
  func.func @focal_loss_kernel(%arg0: i32, %arg1: memref<8x3xf32, #tpu.memory_space<vmem>>, %arg2: memref<8x1xi32, #tpu.memory_space<vmem>>, %arg3: memref<8x1xf32, #tpu.memory_space<vmem>>, %arg4: memref<1x8x128xf32, #tpu.memory_space<vmem>>) attributes {dimension_semantics = [#tpu.dimension_semantics<parallel>], iteration_bounds = array<i64: 1>, scalar_prefetch = 0 : i64, scratch_operands = 0 : i64, tpu.core_type = #tpu.core_type<tc>, window_params = [{transform_indices = @transform_0, window_bounds = array<i64: 8, 3>}, {transform_indices = @transform_1, window_bounds = array<i64: 8, 1>}, {transform_indices = @transform_2, window_bounds = array<i64: 8, 1>}, {transform_indices = @transform_3, window_bounds = array<i64: 1, 8, 128>}]} {
    %c0 = arith.constant 0 : index
    %c0_0 = arith.constant 0 : index
    %0 = vector.load %arg1[%c0, %c0_0] : memref<8x3xf32, #tpu.memory_space<vmem>>, vector<8x3xf32>
    %c0_1 = arith.constant 0 : index
    %c0_2 = arith.constant 0 : index
    %1 = vector.load %arg2[%c0_1, %c0_2] : memref<8x1xi32, #tpu.memory_space<vmem>>, vector<8x1xi32>
    %c0_3 = arith.constant 0 : index
    %c0_4 = arith.constant 0 : index
    %2 = vector.load %arg3[%c0_3, %c0_4] : memref<8x1xf32, #tpu.memory_space<vmem>>, vector<8x1xf32>
    %cst = arith.constant dense<0xFF800000> : vector<8xf32>
    %3 = vector.multi_reduction <maximumf>, %0, %cst [1] : vector<8x3xf32> to vector<8xf32>
    %4 = vector.shape_cast %3 : vector<8xf32> to vector<8x1xf32>
    %5 = vector.broadcast %4 : vector<8x1xf32> to vector<8x3xf32>
    %6 = arith.subf %0, %5 : vector<8x3xf32>
    %7 = math.exp %6 : vector<8x3xf32>
    %cst_5 = arith.constant dense<0.000000e+00> : vector<8xf32>
    %8 = vector.multi_reduction <add>, %7, %cst_5 [1] : vector<8x3xf32> to vector<8xf32>
    %9 = vector.shape_cast %8 : vector<8xf32> to vector<8x1xf32>
    %10 = math.log %9 : vector<8x1xf32>
    %11 = arith.addf %4, %10 : vector<8x1xf32>
    %12 = tpu.iota {dimensions = array<i32: 1>} : vector<8x3xi32>
    %13 = vector.broadcast %1 : vector<8x1xi32> to vector<8x3xi32>
    %14 = arith.cmpi eq, %12, %13 : vector<8x3xi32>
    %cst_6 = arith.constant 0.000000e+00 : f32
    %15 = vector.broadcast %cst_6 : f32 to vector<8x3xf32>
    %16 = arith.select %14, %0, %15 : vector<8x3xi1>, vector<8x3xf32>
    %cst_7 = arith.constant dense<0.000000e+00> : vector<8xf32>
    %17 = vector.multi_reduction <add>, %16, %cst_7 [1] : vector<8x3xf32> to vector<8xf32>
    %18 = vector.shape_cast %17 : vector<8xf32> to vector<8x1xf32>
    %19 = arith.subf %11, %18 : vector<8x1xf32>
    %cst_8 = arith.constant 0.000000e+00 : f32
    %20 = vector.broadcast %cst_8 : f32 to vector<8x1xf32>
    %21 = arith.maximumf %19, %20 : vector<8x1xf32>
    %cst_9 = arith.constant 0.000000e+00 : f32
    %22 = vector.broadcast %cst_9 : f32 to vector<8x1xf32>
    %23 = arith.subf %22, %21 : vector<8x1xf32>
    %24 = math.exp %23 : vector<8x1xf32>
    %cst_10 = arith.constant 1.000000e+00 : f32
    %25 = vector.broadcast %cst_10 : f32 to vector<8x1xf32>
    %26 = arith.subf %25, %24 : vector<8x1xf32>
    %27 = arith.mulf %26, %26 : vector<8x1xf32>
    %28 = arith.mulf %2, %27 : vector<8x1xf32>
    %29 = arith.mulf %28, %21 : vector<8x1xf32>
    %30 = tpu.iota {dimensions = array<i32: 0>} : vector<8x1xi32>
    %c8_i32 = arith.constant 8 : i32
    %31 = arith.muli %arg0, %c8_i32 : i32
    %32 = vector.broadcast %31 : i32 to vector<8x1xi32>
    %33 = arith.addi %30, %32 : vector<8x1xi32>
    %c8_i32_11 = arith.constant 8 : i32
    %34 = vector.broadcast %c8_i32_11 : i32 to vector<8x1xi32>
    %35 = arith.cmpi slt, %33, %34 : vector<8x1xi32>
    %cst_12 = arith.constant 0.000000e+00 : f32
    %36 = vector.broadcast %cst_12 : f32 to vector<8x1xf32>
    %37 = arith.select %35, %29, %36 : vector<8x1xi1>, vector<8x1xf32>
    %38 = vector.shape_cast %37 : vector<8x1xf32> to vector<1x8x1xf32>
    %cst_13 = arith.constant dense<0.000000e+00> : vector<1xf32>
    %39 = vector.multi_reduction <add>, %38, %cst_13 [1, 2] : vector<1x8x1xf32> to vector<1xf32>
    %40 = vector.shape_cast %39 : vector<1xf32> to vector<1x1x1xf32>
    %41 = vector.extract %40[0, 0, 0] : f32 from vector<1x1x1xf32>
    %42 = vector.broadcast %41 : f32 to vector<1x8x128xf32>
    %c0_14 = arith.constant 0 : index
    %c0_15 = arith.constant 0 : index
    %c0_16 = arith.constant 0 : index
    %43 = vector.load %arg4[%c0_14, %c0_15, %c0_16] : memref<1x8x128xf32, #tpu.memory_space<vmem>>, vector<1x8x128xf32>
    tpu.vector_store %arg4[%c0_14, %c0_15, %c0_16], %42 {strides = array<i32>} : memref<1x8x128xf32, #tpu.memory_space<vmem>>, vector<1x8x128xf32>,
    return
  }
  func.func @transform_0(%arg0: i32) -> (i32, i32) {
    %c0_i32 = arith.constant 0 : i32
    %c0_i32_0 = arith.constant 0 : i32
    return %arg0, %c0_i32 : i32, i32
  }
  func.func @transform_1(%arg0: i32) -> (i32, i32) {
    %c0_i32 = arith.constant 0 : i32
    %c0_i32_0 = arith.constant 0 : i32
    return %arg0, %c0_i32 : i32, i32
  }
  func.func @transform_2(%arg0: i32) -> (i32, i32) {
    %c0_i32 = arith.constant 0 : i32
    %c0_i32_0 = arith.constant 0 : i32
    return %arg0, %c0_i32 : i32, i32
  }
  func.func @transform_3(%arg0: i32) -> (i32, i32, i32) {
    %c0_i32 = arith.constant 0 : i32
    %c0_i32_0 = arith.constant 0 : i32
    %c0_i32_1 = arith.constant 0 : i32
    return %arg0, %c0_i32, %c0_i32_0 : i32, i32, i32
  }
}

</mosaic_0001>

<llo_original>
// kernel: tpu_custom_call.1
$region0: #{tpu_custom_call.1}
  #allocation0 [shape = 'u32[]', space=smem, size = 0x4, offset = 0x4, fixed_abs, tag = 'smem constant byte address 0x4 - core index']
  #allocation1 [shape = 'u32[72,128]{1,0:T(1,128)}', space=vmem, size = 0x9000, scoped, tag = 'internal scratch']
  %s0 = inlined_call_operand.vmem [shape: f32[8,3], index: 0, kind: input, shape index: {}]
  %s1 = inlined_call_operand.vmem [shape: s32[8,1], index: 1, kind: input, shape index: {}]
  %s2 = inlined_call_operand.vmem [shape: f32[8,1], index: 2, kind: input, shape index: {}]
  %s3 = inlined_call_operand.hbm [shape: f32[1,8,128], index: 3, kind: output, shape index: {}]
  %s4 = sld [smem:[#allocation0]]
  $region22: #{tpu_custom_call.1} parent=0
    _
  %s6 = ssub.s32 1, %s4
  %s7 = scalar_select 0, %s6, %s4
  $region1: #{tpu_custom_call.1} parent=0
    #allocation2 [shape = 'u8[4096]{0}', space=vmem, size = 0x1000, scoped, tag = 'output window, operand 0, single buffered']
    #allocation3 [shape = 's32[1]{0}', space=sflag, size = 0x4, scoped, tag = 'scoped memory for tpu_custom_call.1']
    %8 = vsyncpa [#allocation3], 0
    // Predicated region
    $region2: #{tpu_custom_call.1} parent=1 // pred_check
      _
    $region3: #{tpu_custom_call.1} parent=1 // pred_check_branch
      %10 = sbr.rel (0) target = $region5
    $region4: #{tpu_custom_call.1} parent=1 // pred_region
      _
    $region5: #{tpu_custom_call.1} parent=1 // pred_fallthru
      _
    // Predicated region
    $region6: #{tpu_custom_call.1} parent=1 // pred_check
      _
    $region7: #{tpu_custom_call.1} parent=1 // pred_check_branch
      %12 = sbr.rel (0) target = $region9
    $region8: #{tpu_custom_call.1} parent=1 // pred_region
      _
    $region9: #{tpu_custom_call.1} parent=1 // pred_fallthru
      _
    // Predicated region
    $region10: #{tpu_custom_call.1} parent=1 // pred_check
      _
    $region11: #{tpu_custom_call.1} parent=1 // pred_check_branch
      %14 = sbr.rel (0) target = $region13
    $region12: #{tpu_custom_call.1} parent=1 // pred_region
      _
    $region13: #{tpu_custom_call.1} parent=1 // pred_fallthru
      _
    %v15 = vld [vmem:[%s0] sm:$0xff]
    %v16 = vld [vmem:[%s1] sm:$0xff]
    %v17 = vld [vmem:[%s2] sm:$0xff]
    %vm18 = vcmask 23552
    %v19 = vsel %vm18, %v15, -inf
    %20 = vmax.xlane.f32.xlu0 %v19
    %v21 = vpop.xlane.xlu0 %20
    %v22 = vsub.f32 %v15, %v21
    %v23 = vmul.f32 %v22, 1.442695
    %v24 = vpow.pop %v23
    %v25 = vsel %vm18, %v24, 0.0
    %26 = vadd.xlane.f32.xlu0 %v25
    %v27 = vpop.xlane.xlu0 %26
    %v28 = vlog2.pop %v27
    %v29 = vmul.f32 %v28, 0.6931472
    %v30 = vadd.f32 %v21, %v29
    %v31 = vlaneseq
    %v32 = vand.u32 %v31, 127
    %33 = vset.pattern.permute.xlu0 0
    %34 = vperm.xlu0 %33, %v16
    %v35 = vpop.permute.xlu0 %34
    %vm36 = vcmp.eq.s32.totalorder %v32, %v35
    %v37 = vsel %vm36, %v15, 0.0
    %v38 = vsel %vm18, %v37, 0.0
    %39 = vadd.xlane.f32.xlu0 %v38
    %v40 = vpop.xlane.xlu0 %39
    %v41 = vsub.f32 %v30, %v40
    %v42 = vmax.f32 %v41, 0.0
    %v43 = vsub.f32 0.0, %v42
    %v44 = vmul.f32 %v43, 1.442695
    %v45 = vpow.pop %v44
    %v46 = vsub.f32 1.0, %v45
    %v47 = vmul.f32 %v46, %v46
    %v48 = vmul.f32 %v17, %v47
    %v49 = vmul.f32 %v48, %v42
    %v50 = vlaneseq
    %v51 = vshrl.u32 %v50, 7
    %s52 = smul.u32 0, 8
    %v53 = vstv %s52
    %v54 = vadd.s32 %v51, %v53
    %vm55 = vcmp.lt.s32.totalorder %v54, 8
    %v56 = vsel %vm55, %v49, 0.0
    %vm57 = vcmask 7168
    %v58 = vsel %vm57, %v56, 0.0
    %59 = vadd.xlane.f32.xlu0 %v58
    %v60 = vpop.xlane.xlu0 %59
    %v61 = vrot.slane %v60, 4
    %v62 = vadd.f32 %v60, %v61
    %v63 = vrot.slane %v62, 2
    %v64 = vadd.f32 %v62, %v63
    %v65 = vrot.slane %v64, 1
    %v66 = vadd.f32 %v64, %v65
    %s67 = vtos %v66
    %v68 = vstv %s67
    %69 = vst [vmem:[#allocation2] sm:$0xff] %v68
    // Predicated region
    $region14: #{tpu_custom_call.1} parent=1 // pred_check
      _
    $region15: #{tpu_custom_call.1} parent=1 // pred_check_branch
      %71 = sbr.rel (0) target = $region17
    $region16: #{tpu_custom_call.1} parent=1 // pred_region
      %73 = vsyncadd [#allocation3], 0
      %s75 = sshll.u32 [#allocation2], 4
      %s76 = int_to_ptr.vmem [resolvable:$true] %s75
      %s77 = sshll.u32 %s3, 4
      %s78 = int_to_ptr.hbm [resolvable:$true] %s77
      %80 = dma.vmem_to_hbm [thread:$0]  %s76, 128, %s78, [#allocation3]
    $region17: #{tpu_custom_call.1} parent=1 // pred_fallthru
      _
    // Predicated region
    $region18: #{tpu_custom_call.1} parent=1 // pred_check
      _
    $region19: #{tpu_custom_call.1} parent=1 // pred_check_branch
      %82 = sbr.rel (0) target = $region21
    $region20: #{tpu_custom_call.1} parent=1 // pred_region
      %84 = dma.done [#allocation3], 128
    $region21: #{tpu_custom_call.1} parent=1 // pred_fallthru
      _
    %85 = vsyncpa [#allocation3], 1

</llo_original>
